<compile_context>
chip_gen: v5e
topology: v5e:2x2
jax: 0.10.0
libtpu: 0.0.40
codegen_flags: <defaults>
</compile_context>

<pallas_src>
import functools

import jax
import jax.numpy as jnp
from jax.experimental import pallas as pl
from jax.experimental.pallas import tpu as pltpu


def _dwsep_kernel(x_ref, dw_ref, mask_ref, pw_ref, o_ref, *, W, K):
    """Fused depthwise(KxK, 'same') + pointwise(1x1) for one batch tile.

    x_ref   : (R_in, S)       R_in = B_T*C_in rows (batch folded on sublanes),
                              S = H*W lane-dense spatial axis.
    dw_ref  : (K*K, R_in, 1)  per-row depthwise tap weights, row-major (kh,kw).
    mask_ref: (K*K, 1, S)     precombined f32 0/1 boundary masks per tap.
    pw_ref  : (R_out, R_in)   block-diagonal kron(I_BT, pointwise) weight.
    o_ref   : (R_out, S)      R_out = B_T*C_out.
    """
    S = x_ref.shape[1]
    x = x_ref[...]                                     # (R_in, S)
    r = K // 2

    acc = None
    k = 0
    for dh in range(-r, r + 1):
        for dwo in range(-r, r + 1):
            delta = dh * W + dwo
            # Shifted window via a lane roll (XLU slot — free vs. the VALU).
            shifted = pltpu.roll(x, (-delta) % S, axis=1) if delta else x
            if dh == 0 and dwo == 0:
                # Centre tap: mask is identically 1 — skip the mask multiply.
                term = shifted * dw_ref[k]
            else:
                # (1,S) hoisted spatial mask, then (R_in,1) per-row tap weight.
                term = (shifted * mask_ref[k]) * dw_ref[k]
            acc = term if acc is None else acc + term
            k += 1

    # Pointwise 1x1 conv: one block-diagonal (R_out,R_in)@(R_in,S) MXU matmul.
    # HIGHEST kept for exact f32 parity; the MXU is otherwise idle here.
    y = jnp.dot(pw_ref[...], acc,
                preferred_element_type=jnp.float32,
                precision=jax.lax.Precision.HIGHEST)
    o_ref[...] = y.astype(o_ref.dtype)


def _vmem_need_bytes(bt, C_in, C_out, S):
    rows_in, rows_out = bt * C_in, bt * C_out
    # 2x double-buffered input block + 2x output block + f32 acc + shifted temp.
    return 4 * S * (2 * rows_in + 2 * rows_out + rows_in + rows_in)


def _pick_batch_tile(N, C_in, C_out, S, vmem_budget):
    """Smallest batch tile that fills the 8 sublanes, fits the VMEM budget and
    satisfies Mosaic's sublane-tiling constraint (rows % 8 == 0 or full dim)."""
    divisors = [d for d in range(1, N + 1) if N % d == 0]

    def legal(bt):
        return bt == N or ((bt * C_in) % 8 == 0 and (bt * C_out) % 8 == 0)

    def fits(bt):
        return _vmem_need_bytes(bt, C_in, C_out, S) <= vmem_budget

    good = [bt for bt in divisors if legal(bt) and bt * C_in >= 8 and fits(bt)]
    if good:
        return min(good)          # smallest tile with full sublane occupancy
    ok = [bt for bt in divisors if legal(bt) and fits(bt)]
    if ok:
        return max(ok)
    return N                      # always legal; may exceed the soft budget


def depthwise_conv2d(x, dw_weight, pw_weight, *, padding):
    """Forward pass of DepthwiseConv2d as a single fused Pallas TPU kernel.

    x        : (N, C_in, H, W) float32, NCHW (PyTorch layout)
    dw_weight: (C_in, 1, K, K) depthwise Conv2d weight (groups=C_in, bias=False)
    pw_weight: (C_out, C_in, 1, 1) pointwise Conv2d weight (bias=False)
    returns  : (N, C_out, H, W) float32
    """
    N, C_in, H, W = x.shape
    C_out = pw_weight.shape[0]
    K = dw_weight.shape[-1]
    assert dw_weight.shape == (C_in, 1, K, K)
    assert pw_weight.shape == (C_out, C_in, 1, 1)
    # TODO(synk): only 'same' depthwise padding (padding == K//2, odd K) is
    # implemented; other padding values need a cropped output layout.
    assert K % 2 == 1 and padding == K // 2, "only padding == kernel_size//2"
    S = H * W
    r = K // 2

    # Per-generation VMEM budget: half physical VMEM, capped at 96 MiB
    # (-> ~32 MiB on v7x, ~64 MiB on v5e/v6e).
    try:
        vmem_cap = pltpu.get_tpu_info().vmem_capacity_bytes
    except Exception:
        vmem_cap = 64 * 1024 * 1024            # conservative (v7x-sized) fallback
    vmem_budget = int(min(vmem_cap // 2, 96 * 1024 * 1024))

    B_T = _pick_batch_tile(N, C_in, C_out, S, vmem_budget)
    R_in, R_out = B_T * C_in, B_T * C_out

    # Lane-dense layout with batch folded onto sublanes: row j = n*C_in + c.
    x_rows = x.reshape(N * C_in, S)

    # Depthwise taps -> (K*K, R_in, 1): row-major (kh, kw), tiled over the
    # batch tile so row j = n*C_in + c carries dw_weight[c, 0, kh, kw].
    dw_taps = jnp.transpose(dw_weight.reshape(C_in, K * K), (1, 0))    # (K*K, C_in)
    dw_taps = jnp.tile(dw_taps, (1, B_T))[:, :, None]                  # (K*K, R_in, 1)

    # Precombined boundary masks (hoisted out of the tap loop, (1,S) width):
    # the kernel does zero integer / compare work.
    hh = jnp.arange(S, dtype=jnp.int32) // W
    ww = jnp.arange(S, dtype=jnp.int32) % W
    masks = []
    for dh in range(-r, r + 1):
        for dwo in range(-r, r + 1):
            valid = ((hh >= -dh) & (hh < H - dh) &
                     (ww >= -dwo) & (ww < W - dwo))
            masks.append(valid.astype(jnp.float32))
    mask_arr = jnp.stack(masks).reshape(K * K, 1, S)

    # Block-diagonal pointwise weight: y_rows = kron(I_BT, pw) @ acc_rows.
    pw_mat = pw_weight.reshape(C_out, C_in).astype(jnp.float32)
    pw_block = jnp.kron(jnp.eye(B_T, dtype=jnp.float32), pw_mat)       # (R_out, R_in)

    kernel = functools.partial(_dwsep_kernel, W=W, K=K)
    flops = 2 * N * S * C_in * (K * K + C_out)
    bytes_accessed = 4 * (N * C_in * S + N * C_out * S
                          + K * K * (R_in + S) + R_out * R_in)

    out_rows = pl.pallas_call(
        kernel,
        out_shape=jax.ShapeDtypeStruct((N * C_out, S), jnp.float32),
        grid_spec=pltpu.PrefetchScalarGridSpec(
            num_scalar_prefetch=0,
            grid=(N // B_T,),                  # independent batch tiles
            in_specs=[
                pl.BlockSpec((R_in, S), lambda n: (n, 0)),
                pl.BlockSpec((K * K, R_in, 1), lambda n: (0, 0, 0)),
                pl.BlockSpec((K * K, 1, S), lambda n: (0, 0, 0)),
                pl.BlockSpec((R_out, R_in), lambda n: (0, 0)),
            ],
            out_specs=pl.BlockSpec((R_out, S), lambda n: (n, 0)),
        ),
        compiler_params=pltpu.CompilerParams(
            dimension_semantics=("parallel",),     # megacore split on v7x
            vmem_limit_bytes=vmem_budget,
        ),
        cost_estimate=pl.CostEstimate(
            flops=flops, transcendentals=0, bytes_accessed=bytes_accessed),
    )(x_rows, dw_taps, mask_arr, pw_block)

    return out_rows.reshape(N, C_out, H, W)


if __name__ == "__main__":
    N, C_in, C_out, H, W = 2, 4, 8, 16, 16
    K, padding = 3, 1

    key = jax.random.PRNGKey(0)
    kx, kdw, kpw = jax.random.split(key, 3)
    x = jax.random.normal(kx, (N, C_in, H, W), jnp.float32)
    dw_weight = 0.3 * jax.random.normal(kdw, (C_in, 1, K, K), jnp.float32)
    pw_weight = 0.3 * jax.random.normal(kpw, (C_out, C_in, 1, 1), jnp.float32)

    fn = jax.jit(functools.partial(depthwise_conv2d, padding=padding))
    out = jax.block_until_ready(fn(x, dw_weight, pw_weight))

    # Independent reference (XLA convolutions with PyTorch Conv2d semantics).
    def ref(x, dw_w, pw_w):
        y = jax.lax.conv_general_dilated(
            x, dw_w, window_strides=(1, 1),
            padding=[(padding, padding), (padding, padding)],
            dimension_numbers=("NCHW", "OIHW", "NCHW"),
            feature_group_count=C_in,
            precision=jax.lax.Precision.HIGHEST)
        return jax.lax.conv_general_dilated(
            y, pw_w, window_strides=(1, 1), padding="VALID",
            dimension_numbers=("NCHW", "OIHW", "NCHW"),
            precision=jax.lax.Precision.HIGHEST)

    expected = ref(x, dw_weight, pw_weight)
    assert out.shape == (N, C_out, H, W)
    assert jnp.allclose(out, expected, atol=1e-4, rtol=1e-4), \
        "mismatch vs XLA conv reference"
    print("KERNEL_OK")
</pallas_src>

<mosaic_0001>
module attributes {stable_mosaic.version = 11 : i64} {
  func.func @_dwsep_kernel(%arg0: i32, %arg1: memref<8x256xf32, #tpu.memory_space<vmem>>, %arg2: memref<9x8x1xf32, #tpu.memory_space<vmem>>, %arg3: memref<9x1x256xf32, #tpu.memory_space<vmem>>, %arg4: memref<16x8xf32, #tpu.memory_space<vmem>>, %arg5: memref<16x256xf32, #tpu.memory_space<vmem>>) attributes {dimension_semantics = [#tpu.dimension_semantics<parallel>], iteration_bounds = array<i64: 1>, scalar_prefetch = 0 : i64, scratch_operands = 0 : i64, tpu.core_type = #tpu.core_type<tc>, window_params = [{transform_indices = @transform_0, window_bounds = array<i64: 8, 256>}, {pipeline_mode = #tpu.pipeline_mode<synchronous>, transform_indices = @transform_1, window_bounds = array<i64: 9, 8, 1>}, {pipeline_mode = #tpu.pipeline_mode<synchronous>, transform_indices = @transform_2, window_bounds = array<i64: 9, 1, 256>}, {pipeline_mode = #tpu.pipeline_mode<synchronous>, transform_indices = @transform_3, window_bounds = array<i64: 16, 8>}, {transform_indices = @transform_4, window_bounds = array<i64: 16, 256>}]} {
    %c0 = arith.constant 0 : index
    %c0_0 = arith.constant 0 : index
    %0 = vector.load %arg1[%c0, %c0_0] : memref<8x256xf32, #tpu.memory_space<vmem>>, vector<8x256xf32>
    %c17_i32 = arith.constant 17 : i32
    %1 = tpu.dynamic_rotate %0 by %c17_i32 dim 1 : vector<8x256xf32>, i32 -> vector<8x256xf32>
    %c0_1 = arith.constant 0 : index
    %c0_2 = arith.constant 0 : index
    %c0_3 = arith.constant 0 : index
    %2 = vector.load %arg3[%c0_1, %c0_2, %c0_3] : memref<9x1x256xf32, #tpu.memory_space<vmem>>, vector<1x1x256xf32>
    %3 = vector.shape_cast %2 : vector<1x1x256xf32> to vector<1x256xf32>
    %4 = vector.broadcast %3 : vector<1x256xf32> to vector<8x256xf32>
    %5 = arith.mulf %1, %4 : vector<8x256xf32>
    %c0_4 = arith.constant 0 : index
    %c0_5 = arith.constant 0 : index
    %c0_6 = arith.constant 0 : index
    %6 = vector.load %arg2[%c0_4, %c0_5, %c0_6] : memref<9x8x1xf32, #tpu.memory_space<vmem>>, vector<1x8x1xf32>
    %7 = vector.shape_cast %6 : vector<1x8x1xf32> to vector<8x1xf32>
    %8 = vector.broadcast %7 : vector<8x1xf32> to vector<8x256xf32>
    %9 = arith.mulf %5, %8 : vector<8x256xf32>
    %c16_i32 = arith.constant 16 : i32
    %10 = tpu.dynamic_rotate %0 by %c16_i32 dim 1 : vector<8x256xf32>, i32 -> vector<8x256xf32>
    %c1 = arith.constant 1 : index
    %c0_7 = arith.constant 0 : index
    %c0_8 = arith.constant 0 : index
    %11 = vector.load %arg3[%c1, %c0_7, %c0_8] : memref<9x1x256xf32, #tpu.memory_space<vmem>>, vector<1x1x256xf32>
    %12 = vector.shape_cast %11 : vector<1x1x256xf32> to vector<1x256xf32>
    %13 = vector.broadcast %12 : vector<1x256xf32> to vector<8x256xf32>
    %14 = arith.mulf %10, %13 : vector<8x256xf32>
    %c1_9 = arith.constant 1 : index
    %c0_10 = arith.constant 0 : index
    %c0_11 = arith.constant 0 : index
    %15 = vector.load %arg2[%c1_9, %c0_10, %c0_11] : memref<9x8x1xf32, #tpu.memory_space<vmem>>, vector<1x8x1xf32>
    %16 = vector.shape_cast %15 : vector<1x8x1xf32> to vector<8x1xf32>
    %17 = vector.broadcast %16 : vector<8x1xf32> to vector<8x256xf32>
    %18 = arith.mulf %14, %17 : vector<8x256xf32>
    %19 = arith.addf %9, %18 : vector<8x256xf32>
    %c15_i32 = arith.constant 15 : i32
    %20 = tpu.dynamic_rotate %0 by %c15_i32 dim 1 : vector<8x256xf32>, i32 -> vector<8x256xf32>
    %c2 = arith.constant 2 : index
    %c0_12 = arith.constant 0 : index
    %c0_13 = arith.constant 0 : index
    %21 = vector.load %arg3[%c2, %c0_12, %c0_13] : memref<9x1x256xf32, #tpu.memory_space<vmem>>, vector<1x1x256xf32>
    %22 = vector.shape_cast %21 : vector<1x1x256xf32> to vector<1x256xf32>
    %23 = vector.broadcast %22 : vector<1x256xf32> to vector<8x256xf32>
    %24 = arith.mulf %20, %23 : vector<8x256xf32>
    %c2_14 = arith.constant 2 : index
    %c0_15 = arith.constant 0 : index
    %c0_16 = arith.constant 0 : index
    %25 = vector.load %arg2[%c2_14, %c0_15, %c0_16] : memref<9x8x1xf32, #tpu.memory_space<vmem>>, vector<1x8x1xf32>
    %26 = vector.shape_cast %25 : vector<1x8x1xf32> to vector<8x1xf32>
    %27 = vector.broadcast %26 : vector<8x1xf32> to vector<8x256xf32>
    %28 = arith.mulf %24, %27 : vector<8x256xf32>
    %29 = arith.addf %19, %28 : vector<8x256xf32>
    %c1_i32 = arith.constant 1 : i32
    %30 = tpu.dynamic_rotate %0 by %c1_i32 dim 1 : vector<8x256xf32>, i32 -> vector<8x256xf32>
    %c3 = arith.constant 3 : index
    %c0_17 = arith.constant 0 : index
    %c0_18 = arith.constant 0 : index
    %31 = vector.load %arg3[%c3, %c0_17, %c0_18] : memref<9x1x256xf32, #tpu.memory_space<vmem>>, vector<1x1x256xf32>
    %32 = vector.shape_cast %31 : vector<1x1x256xf32> to vector<1x256xf32>
    %33 = vector.broadcast %32 : vector<1x256xf32> to vector<8x256xf32>
    %34 = arith.mulf %30, %33 : vector<8x256xf32>
    %c3_19 = arith.constant 3 : index
    %c0_20 = arith.constant 0 : index
    %c0_21 = arith.constant 0 : index
    %35 = vector.load %arg2[%c3_19, %c0_20, %c0_21] : memref<9x8x1xf32, #tpu.memory_space<vmem>>, vector<1x8x1xf32>
    %36 = vector.shape_cast %35 : vector<1x8x1xf32> to vector<8x1xf32>
    %37 = vector.broadcast %36 : vector<8x1xf32> to vector<8x256xf32>
    %38 = arith.mulf %34, %37 : vector<8x256xf32>
    %39 = arith.addf %29, %38 : vector<8x256xf32>
    %c4 = arith.constant 4 : index
    %c0_22 = arith.constant 0 : index
    %c0_23 = arith.constant 0 : index
    %40 = vector.load %arg2[%c4, %c0_22, %c0_23] : memref<9x8x1xf32, #tpu.memory_space<vmem>>, vector<1x8x1xf32>
    %41 = vector.shape_cast %40 : vector<1x8x1xf32> to vector<8x1xf32>
    %42 = vector.broadcast %41 : vector<8x1xf32> to vector<8x256xf32>
    %43 = arith.mulf %0, %42 : vector<8x256xf32>
    %44 = arith.addf %39, %43 : vector<8x256xf32>
    %c255_i32 = arith.constant 255 : i32
    %45 = tpu.dynamic_rotate %0 by %c255_i32 dim 1 : vector<8x256xf32>, i32 -> vector<8x256xf32>
    %c5 = arith.constant 5 : index
    %c0_24 = arith.constant 0 : index
    %c0_25 = arith.constant 0 : index
    %46 = vector.load %arg3[%c5, %c0_24, %c0_25] : memref<9x1x256xf32, #tpu.memory_space<vmem>>, vector<1x1x256xf32>
    %47 = vector.shape_cast %46 : vector<1x1x256xf32> to vector<1x256xf32>
    %48 = vector.broadcast %47 : vector<1x256xf32> to vector<8x256xf32>
    %49 = arith.mulf %45, %48 : vector<8x256xf32>
    %c5_26 = arith.constant 5 : index
    %c0_27 = arith.constant 0 : index
    %c0_28 = arith.constant 0 : index
    %50 = vector.load %arg2[%c5_26, %c0_27, %c0_28] : memref<9x8x1xf32, #tpu.memory_space<vmem>>, vector<1x8x1xf32>
    %51 = vector.shape_cast %50 : vector<1x8x1xf32> to vector<8x1xf32>
    %52 = vector.broadcast %51 : vector<8x1xf32> to vector<8x256xf32>
    %53 = arith.mulf %49, %52 : vector<8x256xf32>
    %54 = arith.addf %44, %53 : vector<8x256xf32>
    %c241_i32 = arith.constant 241 : i32
    %55 = tpu.dynamic_rotate %0 by %c241_i32 dim 1 : vector<8x256xf32>, i32 -> vector<8x256xf32>
    %c6 = arith.constant 6 : index
    %c0_29 = arith.constant 0 : index
    %c0_30 = arith.constant 0 : index
    %56 = vector.load %arg3[%c6, %c0_29, %c0_30] : memref<9x1x256xf32, #tpu.memory_space<vmem>>, vector<1x1x256xf32>
    %57 = vector.shape_cast %56 : vector<1x1x256xf32> to vector<1x256xf32>
    %58 = vector.broadcast %57 : vector<1x256xf32> to vector<8x256xf32>
    %59 = arith.mulf %55, %58 : vector<8x256xf32>
    %c6_31 = arith.constant 6 : index
    %c0_32 = arith.constant 0 : index
    %c0_33 = arith.constant 0 : index
    %60 = vector.load %arg2[%c6_31, %c0_32, %c0_33] : memref<9x8x1xf32, #tpu.memory_space<vmem>>, vector<1x8x1xf32>
    %61 = vector.shape_cast %60 : vector<1x8x1xf32> to vector<8x1xf32>
    %62 = vector.broadcast %61 : vector<8x1xf32> to vector<8x256xf32>
    %63 = arith.mulf %59, %62 : vector<8x256xf32>
    %64 = arith.addf %54, %63 : vector<8x256xf32>
    %c240_i32 = arith.constant 240 : i32
    %65 = tpu.dynamic_rotate %0 by %c240_i32 dim 1 : vector<8x256xf32>, i32 -> vector<8x256xf32>
    %c7 = arith.constant 7 : index
    %c0_34 = arith.constant 0 : index
    %c0_35 = arith.constant 0 : index
    %66 = vector.load %arg3[%c7, %c0_34, %c0_35] : memref<9x1x256xf32, #tpu.memory_space<vmem>>, vector<1x1x256xf32>
    %67 = vector.shape_cast %66 : vector<1x1x256xf32> to vector<1x256xf32>
    %68 = vector.broadcast %67 : vector<1x256xf32> to vector<8x256xf32>
    %69 = arith.mulf %65, %68 : vector<8x256xf32>
    %c7_36 = arith.constant 7 : index
    %c0_37 = arith.constant 0 : index
    %c0_38 = arith.constant 0 : index
    %70 = vector.load %arg2[%c7_36, %c0_37, %c0_38] : memref<9x8x1xf32, #tpu.memory_space<vmem>>, vector<1x8x1xf32>
    %71 = vector.shape_cast %70 : vector<1x8x1xf32> to vector<8x1xf32>
    %72 = vector.broadcast %71 : vector<8x1xf32> to vector<8x256xf32>
    %73 = arith.mulf %69, %72 : vector<8x256xf32>
    %74 = arith.addf %64, %73 : vector<8x256xf32>
    %c239_i32 = arith.constant 239 : i32
    %75 = tpu.dynamic_rotate %0 by %c239_i32 dim 1 : vector<8x256xf32>, i32 -> vector<8x256xf32>
    %c8 = arith.constant 8 : index
    %c0_39 = arith.constant 0 : index
    %c0_40 = arith.constant 0 : index
    %76 = vector.load %arg3[%c8, %c0_39, %c0_40] : memref<9x1x256xf32, #tpu.memory_space<vmem>>, vector<1x1x256xf32>
    %77 = vector.shape_cast %76 : vector<1x1x256xf32> to vector<1x256xf32>
    %78 = vector.broadcast %77 : vector<1x256xf32> to vector<8x256xf32>
    %79 = arith.mulf %75, %78 : vector<8x256xf32>
    %c8_41 = arith.constant 8 : index
    %c0_42 = arith.constant 0 : index
    %c0_43 = arith.constant 0 : index
    %80 = vector.load %arg2[%c8_41, %c0_42, %c0_43] : memref<9x8x1xf32, #tpu.memory_space<vmem>>, vector<1x8x1xf32>
    %81 = vector.shape_cast %80 : vector<1x8x1xf32> to vector<8x1xf32>
    %82 = vector.broadcast %81 : vector<8x1xf32> to vector<8x256xf32>
    %83 = arith.mulf %79, %82 : vector<8x256xf32>
    %84 = arith.addf %74, %83 : vector<8x256xf32>
    %c0_44 = arith.constant 0 : index
    %c0_45 = arith.constant 0 : index
    %85 = vector.load %arg4[%c0_44, %c0_45] : memref<16x8xf32, #tpu.memory_space<vmem>>, vector<16x8xf32>
    %cst = arith.constant dense<0.000000e+00> : vector<16x256xf32>
    %86 = tpu.matmul %85, %84, %cst {dimension_numbers = #tpu.dot_dimension_numbers<[1], [0], [0], [1], [0, 0, 1, 1], [], []>, precision = #tpu.contract_precision<fp32>} : vector<16x8xf32>, vector<8x256xf32>, vector<16x256xf32> -> vector<16x256xf32>
    %c0_46 = arith.constant 0 : index
    %c0_47 = arith.constant 0 : index
    %87 = vector.load %arg5[%c0_46, %c0_47] : memref<16x256xf32, #tpu.memory_space<vmem>>, vector<16x256xf32>
    tpu.vector_store %arg5[%c0_46, %c0_47], %86 {strides = array<i32>} : memref<16x256xf32, #tpu.memory_space<vmem>>, vector<16x256xf32>,
    return
  }
  func.func @transform_0(%arg0: i32) -> (i32, i32) {
    %c0_i32 = arith.constant 0 : i32
    %c0_i32_0 = arith.constant 0 : i32
    return %arg0, %c0_i32 : i32, i32
  }
  func.func @transform_1(%arg0: i32) -> (i32, i32, i32) {
    %c0_i32 = arith.constant 0 : i32
    %c0_i32_0 = arith.constant 0 : i32
    %c0_i32_1 = arith.constant 0 : i32
    %c0_i32_2 = arith.constant 0 : i32
    return %c0_i32, %c0_i32_0, %c0_i32_1 : i32, i32, i32
  }
  func.func @transform_2(%arg0: i32) -> (i32, i32, i32) {
    %c0_i32 = arith.constant 0 : i32
    %c0_i32_0 = arith.constant 0 : i32
    %c0_i32_1 = arith.constant 0 : i32
    %c0_i32_2 = arith.constant 0 : i32
    return %c0_i32, %c0_i32_0, %c0_i32_1 : i32, i32, i32
  }
  func.func @transform_3(%arg0: i32) -> (i32, i32) {
    %c0_i32 = arith.constant 0 : i32
    %c0_i32_0 = arith.constant 0 : i32
    %c0_i32_1 = arith.constant 0 : i32
    return %c0_i32, %c0_i32_0 : i32, i32
  }
  func.func @transform_4(%arg0: i32) -> (i32, i32) {
    %c0_i32 = arith.constant 0 : i32
    %c0_i32_0 = arith.constant 0 : i32
    return %arg0, %c0_i32 : i32, i32
  }
}

</mosaic_0001>

<llo_original>
// kernel: depthwise_conv2d.1
$region0: #{depthwise_conv2d.1}
  #allocation0 [shape = 'u32[]', space=smem, size = 0x4, offset = 0x4, fixed_abs, tag = 'smem constant byte address 0x4 - core index']
  #allocation1 [shape = 'u32[72,128]{1,0:T(1,128)}', space=vmem, size = 0x9000, scoped, tag = 'internal scratch']
  %s0 = inlined_call_operand.vmem [shape: f32[8,256], index: 0, kind: input, shape index: {}]
  %s1 = inlined_call_operand.vmem [shape: f32[9,8,1], index: 1, kind: input, shape index: {}]
  %s2 = inlined_call_operand.vmem [shape: f32[9,1,256], index: 2, kind: input, shape index: {}]
  %s3 = inlined_call_operand.vmem [shape: f32[16,8], index: 3, kind: input, shape index: {}]
  %s4 = inlined_call_operand.vmem [shape: f32[16,256], index: 4, kind: output, shape index: {}]
  %s5 = sld [smem:[#allocation0]]
  $region26: #{depthwise_conv2d.1} parent=0
    _
  %s7 = ssub.s32 1, %s5
  %s8 = scalar_select 0, %s7, %s5
  // Predicated region
  $region2: #{depthwise_conv2d.1} parent=0 // pred_check
    _
  $region3: #{depthwise_conv2d.1} parent=0 // pred_check_branch
    %10 = sbr.rel (0) target = $region5
  $region4: #{depthwise_conv2d.1} parent=0 // pred_region
    _
  $region5: #{depthwise_conv2d.1} parent=0 // pred_fallthru
    _
  // Predicated region
  $region6: #{depthwise_conv2d.1} parent=0 // pred_check
    _
  $region7: #{depthwise_conv2d.1} parent=0 // pred_check_branch
    %12 = sbr.rel (0) target = $region9
  $region8: #{depthwise_conv2d.1} parent=0 // pred_region
    _
  $region9: #{depthwise_conv2d.1} parent=0 // pred_fallthru
    _
  // Predicated region
  $region10: #{depthwise_conv2d.1} parent=0 // pred_check
    _
  $region11: #{depthwise_conv2d.1} parent=0 // pred_check_branch
    %14 = sbr.rel (0) target = $region13
  $region12: #{depthwise_conv2d.1} parent=0 // pred_region
    _
  $region13: #{depthwise_conv2d.1} parent=0 // pred_fallthru
    _
  // Predicated region
  $region14: #{depthwise_conv2d.1} parent=0 // pred_check
    _
  $region15: #{depthwise_conv2d.1} parent=0 // pred_check_branch
    %16 = sbr.rel (0) target = $region17
  $region16: #{depthwise_conv2d.1} parent=0 // pred_region
    _
  $region17: #{depthwise_conv2d.1} parent=0 // pred_fallthru
    _
  %v17 = vld [vmem:[%s0] sm:$0xff]
  %v18 = vld [vmem:[%s0 + $0x8] sm:$0xff]
  %19 = vrot.lane.b32.xlu0 %v17, 17
  %v20 = vpop.permute.xlu0 %19
  %21 = vrot.lane.b32.xlu0 %v18, 17
  %v22 = vpop.permute.xlu0 %21
  %v23 = vlaneseq
  %v24 = vand.u32 %v23, 127
  %vm25 = vcmp.lt.s32.totalorder %v24, 17
  %v26 = vsel %vm25, %v20, %v22
  %v27 = vsel %vm25, %v22, %v20
  %v28 = vld [vmem:[%s2] sm:$0x3]
  %v30 = vperm.slane %v28, 0
  %v31 = vperm.slane %v28, 1
  %v34 = vmul.f32 %v27, %v30
  %v35 = vmul.f32 %v26, %v31
  %v36 = vld [vmem:[%s1] sm:$0xff]
  %38 = vset.pattern.permute.xlu0 0
  %39 = vperm.xlu0 %38, %v36
  %v40 = vpop.permute.xlu0 %39
  %v42 = vmul.f32 %v34, %v40
  %v43 = vmul.f32 %v35, %v40
  %44 = vrot.lane.b32.xlu0 %v17, 16
  %v45 = vpop.permute.xlu0 %44
  %46 = vrot.lane.b32.xlu0 %v18, 16
  %v47 = vpop.permute.xlu0 %46
  %vm48 = vcmp.lt.s32.totalorder %v24, 16
  %v49 = vsel %vm48, %v45, %v47
  %v50 = vsel %vm48, %v47, %v45
  %s51 = scalar_lea.vmem %s2, 2
  %v52 = vld [vmem:[%s51] sm:$0x3]
  %v54 = vperm.slane %v52, 0
  %v55 = vperm.slane %v52, 1
  %v58 = vmul.f32 %v50, %v54
  %v59 = vmul.f32 %v49, %v55
  %s60 = scalar_lea.vmem %s1, 8
  %v61 = vld [vmem:[%s60] sm:$0xff]
  %63 = vset.pattern.permute.xlu0 0
  %64 = vperm.xlu0 %63, %v61
  %v65 = vpop.permute.xlu0 %64
  %v67 = vmul.f32 %v58, %v65
  %v68 = vmul.f32 %v59, %v65
  %v69 = vadd.f32 %v42, %v67
  %v70 = vadd.f32 %v43, %v68
  %71 = vrot.lane.b32.xlu0 %v17, 15
  %v72 = vpop.permute.xlu0 %71
  %73 = vrot.lane.b32.xlu0 %v18, 15
  %v74 = vpop.permute.xlu0 %73
  %vm75 = vcmp.lt.s32.totalorder %v24, 15
  %v76 = vsel %vm75, %v72, %v74
  %v77 = vsel %vm75, %v74, %v72
  %s78 = scalar_lea.vmem %s2, 4
  %v79 = vld [vmem:[%s78] sm:$0x3]
  %v81 = vperm.slane %v79, 0
  %v82 = vperm.slane %v79, 1
  %v85 = vmul.f32 %v77, %v81
  %v86 = vmul.f32 %v76, %v82
  %s87 = scalar_lea.vmem %s1, 16
  %v88 = vld [vmem:[%s87] sm:$0xff]
  %90 = vset.pattern.permute.xlu0 0
  %91 = vperm.xlu0 %90, %v88
  %v92 = vpop.permute.xlu0 %91
  %v94 = vmul.f32 %v85, %v92
  %v95 = vmul.f32 %v86, %v92
  %v96 = vadd.f32 %v69, %v94
  %v97 = vadd.f32 %v70, %v95
  %98 = vrot.lane.b32.xlu0 %v17, 1
  %v99 = vpop.permute.xlu0 %98
  %100 = vrot.lane.b32.xlu0 %v18, 1
  %v101 = vpop.permute.xlu0 %100
  %vm102 = vcmp.lt.s32.totalorder %v24, 1
  %v103 = vsel %vm102, %v99, %v101
  %v104 = vsel %vm102, %v101, %v99
  %s105 = scalar_lea.vmem %s2, 6
  %v106 = vld [vmem:[%s105] sm:$0x3]
  %v108 = vperm.slane %v106, 0
  %v109 = vperm.slane %v106, 1
  %v112 = vmul.f32 %v104, %v108
  %v113 = vmul.f32 %v103, %v109
  %s114 = scalar_lea.vmem %s1, 24
  %v115 = vld [vmem:[%s114] sm:$0xff]
  %117 = vset.pattern.permute.xlu0 0
  %118 = vperm.xlu0 %117, %v115
  %v119 = vpop.permute.xlu0 %118
  %v121 = vmul.f32 %v112, %v119
  %v122 = vmul.f32 %v113, %v119
  %v123 = vadd.f32 %v96, %v121
  %v124 = vadd.f32 %v97, %v122
  %s125 = scalar_lea.vmem %s1, 32
  %v126 = vld [vmem:[%s125] sm:$0xff]
  %128 = vset.pattern.permute.xlu0 0
  %129 = vperm.xlu0 %128, %v126
  %v130 = vpop.permute.xlu0 %129
  %v132 = vmul.f32 %v17, %v130
  %v133 = vmul.f32 %v18, %v130
  %v134 = vadd.f32 %v123, %v132
  %v135 = vadd.f32 %v124, %v133
  %136 = vrot.lane.b32.xlu0 %v17, 127
  %v137 = vpop.permute.xlu0 %136
  %138 = vrot.lane.b32.xlu0 %v18, 127
  %v139 = vpop.permute.xlu0 %138
  %vm140 = vcmp.lt.s32.totalorder %v24, 127
  %v141 = vsel %vm140, %v137, %v139
  %v142 = vsel %vm140, %v139, %v137
  %s143 = scalar_lea.vmem %s2, 10
  %v144 = vld [vmem:[%s143] sm:$0x3]
  %v146 = vperm.slane %v144, 0
  %v147 = vperm.slane %v144, 1
  %v150 = vmul.f32 %v141, %v146
  %v151 = vmul.f32 %v142, %v147
  %s152 = scalar_lea.vmem %s1, 40
  %v153 = vld [vmem:[%s152] sm:$0xff]
  %155 = vset.pattern.permute.xlu0 0
  %156 = vperm.xlu0 %155, %v153
  %v157 = vpop.permute.xlu0 %156
  %v159 = vmul.f32 %v150, %v157
  %v160 = vmul.f32 %v151, %v157
  %v161 = vadd.f32 %v134, %v159
  %v162 = vadd.f32 %v135, %v160
  %163 = vrot.lane.b32.xlu0 %v17, 113
  %v164 = vpop.permute.xlu0 %163
  %165 = vrot.lane.b32.xlu0 %v18, 113
  %v166 = vpop.permute.xlu0 %165
  %vm167 = vcmp.lt.s32.totalorder %v24, 113
  %v168 = vsel %vm167, %v164, %v166
  %v169 = vsel %vm167, %v166, %v164
  %s170 = scalar_lea.vmem %s2, 12
  %v171 = vld [vmem:[%s170] sm:$0x3]
  %v173 = vperm.slane %v171, 0
  %v174 = vperm.slane %v171, 1
  %v177 = vmul.f32 %v168, %v173
  %v178 = vmul.f32 %v169, %v174
  %s179 = scalar_lea.vmem %s1, 48
  %v180 = vld [vmem:[%s179] sm:$0xff]
  %182 = vset.pattern.permute.xlu0 0
  %183 = vperm.xlu0 %182, %v180
  %v184 = vpop.permute.xlu0 %183
  %v186 = vmul.f32 %v177, %v184
  %v187 = vmul.f32 %v178, %v184
  %v188 = vadd.f32 %v161, %v186
  %v189 = vadd.f32 %v162, %v187
  %190 = vrot.lane.b32.xlu0 %v17, 112
  %v191 = vpop.permute.xlu0 %190
  %192 = vrot.lane.b32.xlu0 %v18, 112
  %v193 = vpop.permute.xlu0 %192
  %vm194 = vcmp.lt.s32.totalorder %v24, 112
  %v195 = vsel %vm194, %v191, %v193
  %v196 = vsel %vm194, %v193, %v191
  %s197 = scalar_lea.vmem %s2, 14
  %v198 = vld [vmem:[%s197] sm:$0x3]
  %v200 = vperm.slane %v198, 0
  %v201 = vperm.slane %v198, 1
  %v204 = vmul.f32 %v195, %v200
  %v205 = vmul.f32 %v196, %v201
  %s206 = scalar_lea.vmem %s1, 56
  %v207 = vld [vmem:[%s206] sm:$0xff]
  %209 = vset.pattern.permute.xlu0 0
  %210 = vperm.xlu0 %209, %v207
  %v211 = vpop.permute.xlu0 %210
  %v213 = vmul.f32 %v204, %v211
  %v214 = vmul.f32 %v205, %v211
  %v215 = vadd.f32 %v188, %v213
  %v216 = vadd.f32 %v189, %v214
  %217 = vrot.lane.b32.xlu0 %v17, 111
  %v218 = vpop.permute.xlu0 %217
  %219 = vrot.lane.b32.xlu0 %v18, 111
  %v220 = vpop.permute.xlu0 %219
  %vm221 = vcmp.lt.s32.totalorder %v24, 111
  %v222 = vsel %vm221, %v218, %v220
  %v223 = vsel %vm221, %v220, %v218
  %s224 = scalar_lea.vmem %s2, 16
  %v225 = vld [vmem:[%s224] sm:$0x3]
  %v227 = vperm.slane %v225, 0
  %v228 = vperm.slane %v225, 1
  %v231 = vmul.f32 %v222, %v227
  %v232 = vmul.f32 %v223, %v228
  %s233 = scalar_lea.vmem %s1, 64
  %v234 = vld [vmem:[%s233] sm:$0xff]
  %236 = vset.pattern.permute.xlu0 0
  %237 = vperm.xlu0 %236, %v234
  %v238 = vpop.permute.xlu0 %237
  %v240 = vmul.f32 %v231, %v238
  %v241 = vmul.f32 %v232, %v238
  %v242 = vadd.f32 %v215, %v240
  %v243 = vadd.f32 %v216, %v241
  %v244 = vld [vmem:[%s3] sm:$0xff]
  %v245 = vld [vmem:[%s3 + $0x8] sm:$0xff]
  %vm246 = vcmask 64512
  %v248 = vsel %vm246, %v244, 0
  %v251 = vsel %vm246, %v245, 0
  %253 = vmatpush.msra.mxu0 0.0
  %254 = vmatpush.msra.mxu0 0.0
  %255 = vmatpush.msra.mxu0 0.0
  %256 = vmatpush.msra.mxu0 0.0
  %257 = vmatpush.msra.mxu0 0.0
  %258 = vmatpush.msra.mxu0 0.0
  %259 = vmatpush.msra.mxu0 0.0
  %260 = vmatpush.msra.mxu0 0.0
  %261 = vmatpush.msra.mxu0 0.0
  %262 = vmatpush.msra.mxu0 0.0
  %263 = vmatpush.msra.mxu0 0.0
  %264 = vmatpush.msra.mxu0 0.0
  %265 = vmatpush.msra.mxu0 0.0
  %266 = vmatpush.msra.mxu0 0.0
  %267 = vmatpush.msra.mxu0 0.0
  %v268 = vand.u32 %v242, 4294901760
  %269 = vmatpush.msra.mxu0 %v268
  %v270 = vand.u32 %v248, 4294901760
  %v271 = vsub.f32 %v248, %v270
  %v272 = vand.u32 %v271, 4294901760
  %v273 = vsub.f32 %v271, %v272
  %v274 = vand.u32 %v273, 4294901760
  %275 = vmatmul.f32.gmra.mxu0 %v274
  %v276 = vpop.f32.mrf.mxu0
  %v277 = vadd.f32 0.0, %v276
  %v278 = vand.u32 %v251, 4294901760
  %v279 = vsub.f32 %v251, %v278
  %v280 = vand.u32 %v279, 4294901760
  %v281 = vsub.f32 %v279, %v280
  %v282 = vand.u32 %v281, 4294901760
  %283 = vmatmul.f32.gmra.mxu0 %v282
  %v284 = vpop.f32.mrf.mxu0
  %v285 = vadd.f32 0.0, %v284
  %286 = vdwg.mxu0
  %287 = vmatpush.msra.mxu0 0.0
  %288 = vmatpush.msra.mxu0 0.0
  %289 = vmatpush.msra.mxu0 0.0
  %290 = vmatpush.msra.mxu0 0.0
  %291 = vmatpush.msra.mxu0 0.0
  %292 = vmatpush.msra.mxu0 0.0
  %293 = vmatpush.msra.mxu0 0.0
  %294 = vmatpush.msra.mxu0 0.0
  %295 = vmatpush.msra.mxu0 0.0
  %296 = vmatpush.msra.mxu0 0.0
  %297 = vmatpush.msra.mxu0 0.0
  %298 = vmatpush.msra.mxu0 0.0
  %299 = vmatpush.msra.mxu0 0.0
  %300 = vmatpush.msra.mxu0 0.0
  %301 = vmatpush.msra.mxu0 0.0
  %v302 = vand.u32 %v242, 4294901760
  %v303 = vsub.f32 %v242, %v302
  %v304 = vand.u32 %v303, 4294901760
  %v305 = vsub.f32 %v303, %v304
  %v306 = vand.u32 %v305, 4294901760
  %307 = vmatpush.msra.mxu0 %v306
  %v308 = vand.u32 %v248, 4294901760
  %309 = vmatmul.f32.gmra.mxu0 %v308
  %v310 = vpop.f32.mrf.mxu0
  %v311 = vadd.f32 %v277, %v310
  %v312 = vand.u32 %v251, 4294901760
  %313 = vmatmul.f32.gmra.mxu0 %v312
  %v314 = vpop.f32.mrf.mxu0
  %v315 = vadd.f32 %v285, %v314
  %316 = vdwg.mxu0
  %317 = vmatpush.msra.mxu0 0.0
  %318 = vmatpush.msra.mxu0 0.0
  %319 = vmatpush.msra.mxu0 0.0
  %320 = vmatpush.msra.mxu0 0.0
  %321 = vmatpush.msra.mxu0 0.0
  %322 = vmatpush.msra.mxu0 0.0
  %323 = vmatpush.msra.mxu0 0.0
  %324 = vmatpush.msra.mxu0 0.0
  %325 = vmatpush.msra.mxu0 0.0
  %326 = vmatpush.msra.mxu0 0.0
  %327 = vmatpush.msra.mxu0 0.0
  %328 = vmatpush.msra.mxu0 0.0
  %329 = vmatpush.msra.mxu0 0.0
  %330 = vmatpush.msra.mxu0 0.0
  %331 = vmatpush.msra.mxu0 0.0
  %v332 = vand.u32 %v242, 4294901760
  %v333 = vsub.f32 %v242, %v332
  %334 = vmatpush.msra.mxu0 %v333
  %v335 = vand.u32 %v248, 4294901760
  %v336 = vsub.f32 %v248, %v335
  %337 = vmatmul.f32.gmra.mxu0 %v336
  %v338 = vpop.f32.mrf.mxu0
  %v339 = vadd.f32 %v311, %v338
  %v340 = vand.u32 %v251, 4294901760
  %v341 = vsub.f32 %v251, %v340
  %342 = vmatmul.f32.gmra.mxu0 %v341
  %v343 = vpop.f32.mrf.mxu0
  %v344 = vadd.f32 %v315, %v343
  %345 = vdwg.mxu0
  %346 = vmatpush.msra.mxu0 0.0
  %347 = vmatpush.msra.mxu0 0.0
  %348 = vmatpush.msra.mxu0 0.0
  %349 = vmatpush.msra.mxu0 0.0
  %350 = vmatpush.msra.mxu0 0.0
  %351 = vmatpush.msra.mxu0 0.0
  %352 = vmatpush.msra.mxu0 0.0
  %353 = vmatpush.msra.mxu0 0.0
  %354 = vmatpush.msra.mxu0 0.0
  %355 = vmatpush.msra.mxu0 0.0
  %356 = vmatpush.msra.mxu0 0.0
  %357 = vmatpush.msra.mxu0 0.0
  %358 = vmatpush.msra.mxu0 0.0
  %359 = vmatpush.msra.mxu0 0.0
  %360 = vmatpush.msra.mxu0 0.0
  %v361 = vand.u32 %v242, 4294901760
  %362 = vmatpush.msra.mxu0 %v361
  %v363 = vand.u32 %v248, 4294901760
  %v364 = vsub.f32 %v248, %v363
  %v365 = vand.u32 %v364, 4294901760
  %366 = vmatmul.f32.gmra.mxu0 %v365
  %v367 = vpop.f32.mrf.mxu0
  %v368 = vadd.f32 %v339, %v367
  %v369 = vand.u32 %v251, 4294901760
  %v370 = vsub.f32 %v251, %v369
  %v371 = vand.u32 %v370, 4294901760
  %372 = vmatmul.f32.gmra.mxu0 %v371
  %v373 = vpop.f32.mrf.mxu0
  %v374 = vadd.f32 %v344, %v373
  %375 = vdwg.mxu0
  %376 = vmatpush.msra.mxu0 0.0
  %377 = vmatpush.msra.mxu0 0.0
  %378 = vmatpush.msra.mxu0 0.0
  %379 = vmatpush.msra.mxu0 0.0
  %380 = vmatpush.msra.mxu0 0.0
  %381 = vmatpush.msra.mxu0 0.0
  %382 = vmatpush.msra.mxu0 0.0
  %383 = vmatpush.msra.mxu0 0.0
  %384 = vmatpush.msra.mxu0 0.0
  %385 = vmatpush.msra.mxu0 0.0
  %386 = vmatpush.msra.mxu0 0.0
  %387 = vmatpush.msra.mxu0 0.0
  %388 = vmatpush.msra.mxu0 0.0
  %389 = vmatpush.msra.mxu0 0.0
  %390 = vmatpush.msra.mxu0 0.0
  %v391 = vand.u32 %v242, 4294901760
  %v392 = vsub.f32 %v242, %v391
  %v393 = vand.u32 %v392, 4294901760
  %394 = vmatpush.msra.mxu0 %v393
  %v395 = vand.u32 %v248, 4294901760
  %396 = vmatmul.f32.gmra.mxu0 %v395
  %v397 = vpop.f32.mrf.mxu0
  %v398 = vadd.f32 %v368, %v397
  %v399 = vand.u32 %v251, 4294901760
  %400 = vmatmul.f32.gmra.mxu0 %v399
  %v401 = vpop.f32.mrf.mxu0
  %v402 = vadd.f32 %v374, %v401
  %403 = vdwg.mxu0
  %404 = vmatpush.msra.mxu0 0.0
  %405 = vmatpush.msra.mxu0 0.0
  %406 = vmatpush.msra.mxu0 0.0
  %407 = vmatpush.msra.mxu0 0.0
  %408 = vmatpush.msra.mxu0 0.0
  %409 = vmatpush.msra.mxu0 0.0
  %410 = vmatpush.msra.mxu0 0.0
  %411 = vmatpush.msra.mxu0 0.0
  %412 = vmatpush.msra.mxu0 0.0
  %413 = vmatpush.msra.mxu0 0.0
  %414 = vmatpush.msra.mxu0 0.0
  %415 = vmatpush.msra.mxu0 0.0
  %416 = vmatpush.msra.mxu0 0.0
  %417 = vmatpush.msra.mxu0 0.0
  %418 = vmatpush.msra.mxu0 0.0
  %v419 = vand.u32 %v242, 4294901760
  %420 = vmatpush.msra.mxu0 %v419
  %v421 = vand.u32 %v248, 4294901760
  %422 = vmatmul.f32.gmra.mxu0 %v421
  %v423 = vpop.f32.mrf.mxu0
  %v424 = vadd.f32 %v398, %v423
  %v425 = vand.u32 %v251, 4294901760
  %426 = vmatmul.f32.gmra.mxu0 %v425
  %v427 = vpop.f32.mrf.mxu0
  %v428 = vadd.f32 %v402, %v427
  %429 = vdwg.mxu0
  %430 = vmatpush.msra.mxu0 0.0
  %431 = vmatpush.msra.mxu0 0.0
  %432 = vmatpush.msra.mxu0 0.0
  %433 = vmatpush.msra.mxu0 0.0
  %434 = vmatpush.msra.mxu0 0.0
  %435 = vmatpush.msra.mxu0 0.0
  %436 = vmatpush.msra.mxu0 0.0
  %437 = vmatpush.msra.mxu0 0.0
  %438 = vmatpush.msra.mxu0 0.0
  %439 = vmatpush.msra.mxu0 0.0
  %440 = vmatpush.msra.mxu0 0.0
  %441 = vmatpush.msra.mxu0 0.0
  %442 = vmatpush.msra.mxu0 0.0
  %443 = vmatpush.msra.mxu0 0.0
  %444 = vmatpush.msra.mxu0 0.0
  %v445 = vand.u32 %v243, 4294901760
  %446 = vmatpush.msra.mxu0 %v445
  %v447 = vand.u32 %v248, 4294901760
  %v448 = vsub.f32 %v248, %v447
  %v449 = vand.u32 %v448, 4294901760
  %v450 = vsub.f32 %v448, %v449
  %v451 = vand.u32 %v450, 4294901760
  %452 = vmatmul.f32.gmra.mxu0 %v451
  %v453 = vpop.f32.mrf.mxu0
  %v454 = vadd.f32 0.0, %v453
  %v455 = vand.u32 %v251, 4294901760
  %v456 = vsub.f32 %v251, %v455
  %v457 = vand.u32 %v456, 4294901760
  %v458 = vsub.f32 %v456, %v457
  %v459 = vand.u32 %v458, 4294901760
  %460 = vmatmul.f32.gmra.mxu0 %v459
  %v461 = vpop.f32.mrf.mxu0
  %v462 = vadd.f32 0.0, %v461
  %463 = vdwg.mxu0
  %464 = vmatpush.msra.mxu0 0.0
  %465 = vmatpush.msra.mxu0 0.0
  %466 = vmatpush.msra.mxu0 0.0
  %467 = vmatpush.msra.mxu0 0.0
  %468 = vmatpush.msra.mxu0 0.0
  %469 = vmatpush.msra.mxu0 0.0
  %470 = vmatpush.msra.mxu0 0.0
  %471 = vmatpush.msra.mxu0 0.0
  %472 = vmatpush.msra.mxu0 0.0
  %473 = vmatpush.msra.mxu0 0.0
  %474 = vmatpush.msra.mxu0 0.0
  %475 = vmatpush.msra.mxu0 0.0
  %476 = vmatpush.msra.mxu0 0.0
  %477 = vmatpush.msra.mxu0 0.0
  %478 = vmatpush.msra.mxu0 0.0
  %v479 = vand.u32 %v243, 4294901760
  %v480 = vsub.f32 %v243, %v479
  %v481 = vand.u32 %v480, 4294901760
  %v482 = vsub.f32 %v480, %v481
  %v483 = vand.u32 %v482, 4294901760
  %484 = vmatpush.msra.mxu0 %v483
  %v485 = vand.u32 %v248, 4294901760
  %486 = vmatmul.f32.gmra.mxu0 %v485
  %v487 = vpop.f32.mrf.mxu0
  %v488 = vadd.f32 %v454, %v487
  %v489 = vand.u32 %v251, 4294901760
  %490 = vmatmul.f32.gmra.mxu0 %v489
  %v491 = vpop.f32.mrf.mxu0
  %v492 = vadd.f32 %v462, %v491
  %493 = vdwg.mxu0
  %494 = vmatpush.msra.mxu0 0.0
  %495 = vmatpush.msra.mxu0 0.0
  %496 = vmatpush.msra.mxu0 0.0
  %497 = vmatpush.msra.mxu0 0.0
  %498 = vmatpush.msra.mxu0 0.0
  %499 = vmatpush.msra.mxu0 0.0
  %500 = vmatpush.msra.mxu0 0.0
  %501 = vmatpush.msra.mxu0 0.0
  %502 = vmatpush.msra.mxu0 0.0
  %503 = vmatpush.msra.mxu0 0.0
  %504 = vmatpush.msra.mxu0 0.0
  %505 = vmatpush.msra.mxu0 0.0
  %506 = vmatpush.msra.mxu0 0.0
  %507 = vmatpush.msra.mxu0 0.0
  %508 = vmatpush.msra.mxu0 0.0
  %v509 = vand.u32 %v243, 4294901760
  %v510 = vsub.f32 %v243, %v509
  %511 = vmatpush.msra.mxu0 %v510
  %v512 = vand.u32 %v248, 4294901760
  %v513 = vsub.f32 %v248, %v512
  %514 = vmatmul.f32.gmra.mxu0 %v513
  %v515 = vpop.f32.mrf.mxu0
  %v516 = vadd.f32 %v488, %v515
  %v517 = vand.u32 %v251, 4294901760
  %v518 = vsub.f32 %v251, %v517
  %519 = vmatmul.f32.gmra.mxu0 %v518
  %v520 = vpop.f32.mrf.mxu0
  %v521 = vadd.f32 %v492, %v520
  %522 = vdwg.mxu0
  %523 = vmatpush.msra.mxu0 0.0
  %524 = vmatpush.msra.mxu0 0.0
  %525 = vmatpush.msra.mxu0 0.0
  %526 = vmatpush.msra.mxu0 0.0
  %527 = vmatpush.msra.mxu0 0.0
  %528 = vmatpush.msra.mxu0 0.0
  %529 = vmatpush.msra.mxu0 0.0
  %530 = vmatpush.msra.mxu0 0.0
  %531 = vmatpush.msra.mxu0 0.0
  %532 = vmatpush.msra.mxu0 0.0
  %533 = vmatpush.msra.mxu0 0.0
  %534 = vmatpush.msra.mxu0 0.0
  %535 = vmatpush.msra.mxu0 0.0
  %536 = vmatpush.msra.mxu0 0.0
  %537 = vmatpush.msra.mxu0 0.0
  %v538 = vand.u32 %v243, 4294901760
  %539 = vmatpush.msra.mxu0 %v538
  %v540 = vand.u32 %v248, 4294901760
  %v541 = vsub.f32 %v248, %v540
  %v542 = vand.u32 %v541, 4294901760
  %543 = vmatmul.f32.gmra.mxu0 %v542
  %v544 = vpop.f32.mrf.mxu0
  %v545 = vadd.f32 %v516, %v544
  %v546 = vand.u32 %v251, 4294901760
  %v547 = vsub.f32 %v251, %v546
  %v548 = vand.u32 %v547, 4294901760
  %549 = vmatmul.f32.gmra.mxu0 %v548
  %v550 = vpop.f32.mrf.mxu0
  %v551 = vadd.f32 %v521, %v550
  %552 = vdwg.mxu0
  %553 = vmatpush.msra.mxu0 0.0
  %554 = vmatpush.msra.mxu0 0.0
  %555 = vmatpush.msra.mxu0 0.0
  %556 = vmatpush.msra.mxu0 0.0
  %557 = vmatpush.msra.mxu0 0.0
  %558 = vmatpush.msra.mxu0 0.0
  %559 = vmatpush.msra.mxu0 0.0
  %560 = vmatpush.msra.mxu0 0.0
  %561 = vmatpush.msra.mxu0 0.0
  %562 = vmatpush.msra.mxu0 0.0
  %563 = vmatpush.msra.mxu0 0.0
  %564 = vmatpush.msra.mxu0 0.0
  %565 = vmatpush.msra.mxu0 0.0
  %566 = vmatpush.msra.mxu0 0.0
  %567 = vmatpush.msra.mxu0 0.0
  %v568 = vand.u32 %v243, 4294901760
  %v569 = vsub.f32 %v243, %v568
  %v570 = vand.u32 %v569, 4294901760
  %571 = vmatpush.msra.mxu0 %v570
  %v572 = vand.u32 %v248, 4294901760
  %573 = vmatmul.f32.gmra.mxu0 %v572
  %v574 = vpop.f32.mrf.mxu0
  %v575 = vadd.f32 %v545, %v574
  %v576 = vand.u32 %v251, 4294901760
  %577 = vmatmul.f32.gmra.mxu0 %v576
  %v578 = vpop.f32.mrf.mxu0
  %v579 = vadd.f32 %v551, %v578
  %580 = vdwg.mxu0
  %581 = vmatpush.msra.mxu0 0.0
  %582 = vmatpush.msra.mxu0 0.0
  %583 = vmatpush.msra.mxu0 0.0
  %584 = vmatpush.msra.mxu0 0.0
  %585 = vmatpush.msra.mxu0 0.0
  %586 = vmatpush.msra.mxu0 0.0
  %587 = vmatpush.msra.mxu0 0.0
  %588 = vmatpush.msra.mxu0 0.0
  %589 = vmatpush.msra.mxu0 0.0
  %590 = vmatpush.msra.mxu0 0.0
  %591 = vmatpush.msra.mxu0 0.0
  %592 = vmatpush.msra.mxu0 0.0
  %593 = vmatpush.msra.mxu0 0.0
  %594 = vmatpush.msra.mxu0 0.0
  %595 = vmatpush.msra.mxu0 0.0
  %v596 = vand.u32 %v243, 4294901760
  %597 = vmatpush.msra.mxu0 %v596
  %v598 = vand.u32 %v248, 4294901760
  %599 = vmatmul.f32.gmra.mxu0 %v598
  %v600 = vpop.f32.mrf.mxu0
  %v601 = vadd.f32 %v575, %v600
  %v602 = vand.u32 %v251, 4294901760
  %603 = vmatmul.f32.gmra.mxu0 %v602
  %v604 = vpop.f32.mrf.mxu0
  %v605 = vadd.f32 %v579, %v604
  %606 = vdwg.mxu0
  %607 = vst [vmem:[%s4] sm:$0xff] %v424
  %608 = vst [vmem:[%s4 + $0x8] sm:$0xff] %v601
  %609 = vst [vmem:[%s4 + $0x10] sm:$0xff] %v428
  %610 = vst [vmem:[%s4 + $0x18] sm:$0xff] %v605
  // Predicated region
  $region18: #{depthwise_conv2d.1} parent=0 // pred_check
    _
  $region19: #{depthwise_conv2d.1} parent=0 // pred_check_branch
    %612 = sbr.rel (0) target = $region21
  $region20: #{depthwise_conv2d.1} parent=0 // pred_region
    _
  $region21: #{depthwise_conv2d.1} parent=0 // pred_fallthru
    _
  // Predicated region
  $region22: #{depthwise_conv2d.1} parent=0 // pred_check
    _
  $region23: #{depthwise_conv2d.1} parent=0 // pred_check_branch
    %614 = sbr.rel (0) target = $region25
  $region24: #{depthwise_conv2d.1} parent=0 // pred_region
    _
  $region25: #{depthwise_conv2d.1} parent=0 // pred_fallthru
    _

</llo_original>
